<compile_context>
chip_gen: v5e
topology: v5e:2x2
jax: 0.10.0
libtpu: 0.0.40
codegen_flags: <defaults>
</compile_context>

<pallas_src>
import jax
import jax.numpy as jnp
from jax.experimental import pallas as pl
from jax.experimental.pallas import tpu as pltpu

SP_K = 7            # spatial_kernel
SP_PAD = SP_K // 2  # = 3


def cbam_kernel(x_ref, w1t_ref, w2t_ref, tsp_ref, o_ref):
    # x_ref  : (Bt, C, HW)   VMEM, lane-dense (HW on lanes)
    # w1t_ref: (C, C//r)     VMEM  (first 1x1 conv weight, transposed)
    # w2t_ref: (C//r, C)     VMEM  (second 1x1 conv weight, transposed)
    # tsp_ref: (2*HW, HW)    VMEM  (7x7 conv expressed as a Toeplitz matrix)
    Bt, C, HW = x_ref.shape
    xf = x_ref[...].astype(jnp.float32)                       # (Bt, C, HW)

    # ---------------- channel attention ----------------
    mx = jnp.max(xf, axis=2)                                   # (Bt, C)  AdaptiveMaxPool2d(1)
    av = jnp.mean(xf, axis=2)                                  # (Bt, C)  AdaptiveAvgPool2d(1)
    pooled = jnp.concatenate([mx, av], axis=0)                 # (2*Bt, C) -> shared MLP, one pass
    h = jnp.maximum(
        jnp.dot(pooled, w1t_ref[...], preferred_element_type=jnp.float32), 0.0)
    out2 = jnp.dot(h, w2t_ref[...], preferred_element_type=jnp.float32)   # (2*Bt, C)
    ch_att = jax.nn.sigmoid(out2[:Bt] + out2[Bt:])             # (Bt, C)

    x2 = xf * ch_att[:, :, None]                               # (Bt, C, HW) lane-dense multiply

    # ---------------- spatial attention ----------------
    mx_s = jnp.max(x2, axis=1)                                 # (Bt, HW) max over channels
    av_s = jnp.mean(x2, axis=1)                                # (Bt, HW) mean over channels
    maps = jnp.concatenate([mx_s, av_s], axis=1)               # (Bt, 2*HW)

    # 7x7 "same" cross-correlation as a single MXU matmul.
    conv = jnp.dot(maps, tsp_ref[...], preferred_element_type=jnp.float32)  # (Bt, HW)
    sp_att = jax.nn.sigmoid(conv)

    o_ref[...] = (x2 * sp_att[:, None, :]).astype(o_ref.dtype)


def build_spatial_toeplitz(wsp, H, W):
    """Express Conv2d(2, 1, K, padding=K//2, bias=False) (cross-correlation) as a
    dense (2*H*W, H*W) matrix T such that conv_flat = maps_flat @ T, where
    maps_flat = [max_map | avg_map] with each map flattened row-major (i*W + j)."""
    K = wsp.shape[-1]
    pad = K // 2
    di = jnp.arange(H)[:, None] - jnp.arange(H)[None, :] + pad   # di[si, i] = si - i + pad
    dj = jnp.arange(W)[:, None] - jnp.arange(W)[None, :] + pad   # dj[sj, j] = sj - j + pad
    mi = (di >= 0) & (di < K)
    mj = (dj >= 0) & (dj < K)
    dic = jnp.clip(di, 0, K - 1)
    djc = jnp.clip(dj, 0, K - 1)
    # T[c, si, sj, i, j] = wsp[c, si - i + pad, sj - j + pad] where that tap exists.
    T = wsp[:, dic[:, None, :, None], djc[None, :, None, :]]          # (2, H, W, H, W)
    T = T * (mi[:, None, :, None] & mj[None, :, None, :]).astype(wsp.dtype)
    return T.reshape(2 * H * W, H * W).astype(jnp.float32)


def _pick_batch_tile(B, max_bt=8):
    bt = min(B, max_bt)
    while B % bt:
        bt -= 1
    return bt


def cbam_pallas(x, w1, w2, wsp, *, max_batch_tile=8):
    """x: (B, C, H, W) f32; w1: (C//r, C); w2: (C, C//r); wsp: (2, K, K)."""
    B, C, H, W = x.shape
    Cr = w1.shape[0]
    HW = H * W
    Bt = _pick_batch_tile(B, max_batch_tile)

    x_flat = x.reshape(B, C, HW)                                 # lane-dense layout
    w1t = jnp.asarray(w1, jnp.float32).T                         # (C, Cr)
    w2t = jnp.asarray(w2, jnp.float32).T                         # (Cr, C)
    tsp = build_spatial_toeplitz(jnp.asarray(wsp, jnp.float32), H, W)  # (2*HW, HW)

    out_flat = pl.pallas_call(
        cbam_kernel,
        out_shape=jax.ShapeDtypeStruct((B, C, HW), x.dtype),
        grid=(B // Bt,),
        in_specs=[
            pl.BlockSpec((Bt, C, HW), lambda b: (b, 0, 0)),
            pl.BlockSpec((C, Cr), lambda b: (0, 0)),
            pl.BlockSpec((Cr, C), lambda b: (0, 0)),
            pl.BlockSpec((2 * HW, HW), lambda b: (0, 0)),
        ],
        out_specs=pl.BlockSpec((Bt, C, HW), lambda b: (b, 0, 0)),
        compiler_params=pltpu.CompilerParams(
            dimension_semantics=("parallel",),
        ),
    )(x_flat, w1t, w2t, tsp)
    return out_flat.reshape(B, C, H, W)


def cbam_reference(x, w1, w2, wsp):
    """Pure-JAX reference matching the PyTorch forward."""
    B, C, H, W = x.shape
    mx = jnp.max(x, axis=(2, 3))                                 # (B, C)
    av = jnp.mean(x, axis=(2, 3))

    def mlp(p):  # p: (B, C)
        return jnp.maximum(p @ w1.T, 0.0) @ w2.T

    ch = jax.nn.sigmoid(mlp(mx) + mlp(av))                       # (B, C)
    x2 = x * ch[:, :, None, None]

    mx_s = jnp.max(x2, axis=1)                                   # (B, H, W)
    av_s = jnp.mean(x2, axis=1)
    maps = jnp.stack([mx_s, av_s], axis=1)                       # (B, 2, H, W)
    pad = jnp.pad(maps, ((0, 0), (0, 0), (SP_PAD, SP_PAD), (SP_PAD, SP_PAD)))
    conv = jnp.zeros((B, H, W), jnp.float32)
    for c in range(2):
        for di in range(SP_K):
            for dj in range(SP_K):
                conv = conv + wsp[c, di, dj] * pad[:, c, di:di + H, dj:dj + W]
    sp = jax.nn.sigmoid(conv)
    return x2 * sp[:, None, :, :]


if __name__ == "__main__":
    # Shapes consistent with CBAM(channel=32, reduction=16, spatial_kernel=7)
    B, C, H, W = 2, 32, 16, 16
    reduction = 16
    Cr = C // reduction

    key = jax.random.PRNGKey(0)
    kx, k1, k2, k3 = jax.random.split(key, 4)
    x = jax.random.normal(kx, (B, C, H, W), dtype=jnp.float32)
    # Deterministic synthetic weights (shapes from nn.Conv2d defs, bias=False).
    w1 = jax.random.normal(k1, (Cr, C), dtype=jnp.float32) * 0.1        # Conv2d(C, C//r, 1)
    w2 = jax.random.normal(k2, (C, Cr), dtype=jnp.float32) * 0.1        # Conv2d(C//r, C, 1)
    wsp = jax.random.normal(k3, (2, SP_K, SP_K), dtype=jnp.float32) * 0.1  # Conv2d(2, 1, 7, pad=3)

    out = cbam_pallas(x, w1, w2, wsp)
    out = jax.block_until_ready(out)

    ref = cbam_reference(x, w1, w2, wsp)
    assert out.shape == (B, C, H, W)
    assert jnp.allclose(out, ref, atol=1e-3, rtol=1e-3), "mismatch vs reference"

    print("KERNEL_OK")
</pallas_src>

<mosaic_0001>
module attributes {stable_mosaic.version = 11 : i64} {
  func.func @cbam_kernel(%arg0: i32, %arg1: memref<2x32x256xf32, #tpu.memory_space<vmem>>, %arg2: memref<32x2xf32, #tpu.memory_space<vmem>>, %arg3: memref<2x32xf32, #tpu.memory_space<vmem>>, %arg4: memref<512x256xf32, #tpu.memory_space<vmem>>, %arg5: memref<2x32x256xf32, #tpu.memory_space<vmem>>) attributes {dimension_semantics = [#tpu.dimension_semantics<parallel>], iteration_bounds = array<i64: 1>, scalar_prefetch = 0 : i64, scratch_operands = 0 : i64, tpu.core_type = #tpu.core_type<tc>, window_params = [{transform_indices = @transform_0, window_bounds = array<i64: 2, 32, 256>}, {pipeline_mode = #tpu.pipeline_mode<synchronous>, transform_indices = @transform_1, window_bounds = array<i64: 32, 2>}, {pipeline_mode = #tpu.pipeline_mode<synchronous>, transform_indices = @transform_2, window_bounds = array<i64: 2, 32>}, {pipeline_mode = #tpu.pipeline_mode<synchronous>, transform_indices = @transform_3, window_bounds = array<i64: 512, 256>}, {transform_indices = @transform_4, window_bounds = array<i64: 2, 32, 256>}]} {
    %c0 = arith.constant 0 : index
    %c0_0 = arith.constant 0 : index
    %c0_1 = arith.constant 0 : index
    %0 = vector.load %arg1[%c0, %c0_0, %c0_1] : memref<2x32x256xf32, #tpu.memory_space<vmem>>, vector<2x32x256xf32>
    %cst = arith.constant dense<0xFF800000> : vector<2x32xf32>
    %1 = vector.multi_reduction <maximumf>, %0, %cst [2] : vector<2x32x256xf32> to vector<2x32xf32>
    %cst_2 = arith.constant dense<0.000000e+00> : vector<2x32xf32>
    %2 = vector.multi_reduction <add>, %0, %cst_2 [2] : vector<2x32x256xf32> to vector<2x32xf32>
    %cst_3 = arith.constant 2.560000e+02 : f32
    %3 = vector.broadcast %cst_3 : f32 to vector<2x32xf32>
    %4 = arith.divf %2, %3 : vector<2x32xf32>
    %5 = tpu.concatenate %1, %4 in 0 : vector<2x32xf32>, vector<2x32xf32> -> vector<4x32xf32>
    %c0_4 = arith.constant 0 : index
    %c0_5 = arith.constant 0 : index
    %6 = vector.load %arg2[%c0_4, %c0_5] : memref<32x2xf32, #tpu.memory_space<vmem>>, vector<32x2xf32>
    %cst_6 = arith.constant dense<0.000000e+00> : vector<4x2xf32>
    %7 = tpu.matmul %5, %6, %cst_6 {dimension_numbers = #tpu.dot_dimension_numbers<[1], [0], [0], [1], [0, 0, 1, 1], [], []>} : vector<4x32xf32>, vector<32x2xf32>, vector<4x2xf32> -> vector<4x2xf32>
    %cst_7 = arith.constant 0.000000e+00 : f32
    %8 = vector.broadcast %cst_7 : f32 to vector<4x2xf32>
    %9 = arith.maximumf %7, %8 : vector<4x2xf32>
    %c0_8 = arith.constant 0 : index
    %c0_9 = arith.constant 0 : index
    %10 = vector.load %arg3[%c0_8, %c0_9] : memref<2x32xf32, #tpu.memory_space<vmem>>, vector<2x32xf32>
    %cst_10 = arith.constant dense<0.000000e+00> : vector<4x32xf32>
    %11 = tpu.matmul %9, %10, %cst_10 {dimension_numbers = #tpu.dot_dimension_numbers<[1], [0], [0], [1], [0, 0, 1, 1], [], []>} : vector<4x2xf32>, vector<2x32xf32>, vector<4x32xf32> -> vector<4x32xf32>
    %12 = vector.extract_strided_slice %11 {offsets = [0, 0], sizes = [2, 32], strides = [1, 1]} : vector<4x32xf32> to vector<2x32xf32>
    %13 = vector.extract_strided_slice %11 {offsets = [2, 0], sizes = [2, 32], strides = [1, 1]} : vector<4x32xf32> to vector<2x32xf32>
    %14 = arith.addf %12, %13 : vector<2x32xf32>
    %15 = arith.negf %14 : vector<2x32xf32>
    %16 = math.exp %15 : vector<2x32xf32>
    %cst_11 = arith.constant 1.000000e+00 : f32
    %17 = vector.broadcast %cst_11 : f32 to vector<2x32xf32>
    %18 = arith.addf %17, %16 : vector<2x32xf32>
    %19 = arith.divf %17, %18 : vector<2x32xf32>
    %20 = vector.shape_cast %19 : vector<2x32xf32> to vector<2x32x1xf32>
    %21 = vector.broadcast %20 : vector<2x32x1xf32> to vector<2x32x256xf32>
    %22 = arith.mulf %0, %21 : vector<2x32x256xf32>
    %cst_12 = arith.constant dense<0xFF800000> : vector<2x256xf32>
    %23 = vector.multi_reduction <maximumf>, %22, %cst_12 [1] : vector<2x32x256xf32> to vector<2x256xf32>
    %cst_13 = arith.constant dense<0.000000e+00> : vector<2x256xf32>
    %24 = vector.multi_reduction <add>, %22, %cst_13 [1] : vector<2x32x256xf32> to vector<2x256xf32>
    %cst_14 = arith.constant 3.200000e+01 : f32
    %25 = vector.broadcast %cst_14 : f32 to vector<2x256xf32>
    %26 = arith.divf %24, %25 : vector<2x256xf32>
    %27 = tpu.concatenate %23, %26 in 1 : vector<2x256xf32>, vector<2x256xf32> -> vector<2x512xf32>
    %c0_15 = arith.constant 0 : index
    %c0_16 = arith.constant 0 : index
    %28 = vector.load %arg4[%c0_15, %c0_16] : memref<512x256xf32, #tpu.memory_space<vmem>>, vector<512x256xf32>
    %cst_17 = arith.constant dense<0.000000e+00> : vector<2x256xf32>
    %29 = tpu.matmul %27, %28, %cst_17 {dimension_numbers = #tpu.dot_dimension_numbers<[1], [0], [0], [1], [0, 0, 1, 1], [], []>} : vector<2x512xf32>, vector<512x256xf32>, vector<2x256xf32> -> vector<2x256xf32>
    %30 = arith.negf %29 : vector<2x256xf32>
    %31 = math.exp %30 : vector<2x256xf32>
    %cst_18 = arith.constant 1.000000e+00 : f32
    %32 = vector.broadcast %cst_18 : f32 to vector<2x256xf32>
    %33 = arith.addf %32, %31 : vector<2x256xf32>
    %34 = arith.divf %32, %33 : vector<2x256xf32>
    %35 = vector.shape_cast %34 : vector<2x256xf32> to vector<2x1x256xf32>
    %36 = vector.broadcast %35 : vector<2x1x256xf32> to vector<2x32x256xf32>
    %37 = arith.mulf %22, %36 : vector<2x32x256xf32>
    %c0_19 = arith.constant 0 : index
    %c0_20 = arith.constant 0 : index
    %c0_21 = arith.constant 0 : index
    %38 = vector.load %arg5[%c0_19, %c0_20, %c0_21] : memref<2x32x256xf32, #tpu.memory_space<vmem>>, vector<2x32x256xf32>
    tpu.vector_store %arg5[%c0_19, %c0_20, %c0_21], %37 {strides = array<i32>} : memref<2x32x256xf32, #tpu.memory_space<vmem>>, vector<2x32x256xf32>,
    return
  }
  func.func @transform_0(%arg0: i32) -> (i32, i32, i32) {
    %c0_i32 = arith.constant 0 : i32
    %c0_i32_0 = arith.constant 0 : i32
    %c0_i32_1 = arith.constant 0 : i32
    return %arg0, %c0_i32, %c0_i32_0 : i32, i32, i32
  }
  func.func @transform_1(%arg0: i32) -> (i32, i32) {
    %c0_i32 = arith.constant 0 : i32
    %c0_i32_0 = arith.constant 0 : i32
    %c0_i32_1 = arith.constant 0 : i32
    return %c0_i32, %c0_i32_0 : i32, i32
  }
  func.func @transform_2(%arg0: i32) -> (i32, i32) {
    %c0_i32 = arith.constant 0 : i32
    %c0_i32_0 = arith.constant 0 : i32
    %c0_i32_1 = arith.constant 0 : i32
    return %c0_i32, %c0_i32_0 : i32, i32
  }
  func.func @transform_3(%arg0: i32) -> (i32, i32) {
    %c0_i32 = arith.constant 0 : i32
    %c0_i32_0 = arith.constant 0 : i32
    %c0_i32_1 = arith.constant 0 : i32
    return %c0_i32, %c0_i32_0 : i32, i32
  }
  func.func @transform_4(%arg0: i32) -> (i32, i32, i32) {
    %c0_i32 = arith.constant 0 : i32
    %c0_i32_0 = arith.constant 0 : i32
    %c0_i32_1 = arith.constant 0 : i32
    return %arg0, %c0_i32, %c0_i32_0 : i32, i32, i32
  }
}

</mosaic_0001>

<llo_original>
// kernel: tpu_custom_call.1
$region0: #{tpu_custom_call.1}
  #allocation0 [shape = 'u32[]', space=smem, size = 0x4, offset = 0x4, fixed_abs, tag = 'smem constant byte address 0x4 - core index']
  #allocation1 [shape = 'u32[72,128]{1,0:T(1,128)}', space=vmem, size = 0x9000, scoped, tag = 'internal scratch']
  %s0 = inlined_call_operand.hbm [shape: f32[2,32,256], index: 0, kind: input, shape index: {}]
  %s1 = inlined_call_operand.vmem [shape: f32[32,2], index: 1, kind: input, shape index: {}]
  %s2 = inlined_call_operand.vmem [shape: f32[2,32], index: 2, kind: input, shape index: {}]
  %s3 = inlined_call_operand.hbm [shape: f32[512,256], index: 3, kind: input, shape index: {}]
  %s4 = inlined_call_operand.hbm [shape: f32[2,32,256], index: 4, kind: output, shape index: {}]
  %s5 = sld [smem:[#allocation0]]
  $region34: #{tpu_custom_call.1} parent=0
    _
  %s7 = ssub.s32 1, %s5
  %s8 = scalar_select 0, %s7, %s5
  $region1: #{tpu_custom_call.1} parent=0
    #allocation2 [shape = 'u8[65536]{0}', space=vmem, size = 0x10000, scoped, tag = 'input window, operand 0, single buffered']
    #allocation3 [shape = 's32[1]{0}', space=sflag, size = 0x4, scoped, tag = 'scoped memory for tpu_custom_call.1']
    #allocation4 [shape = 's32[1]{0}', space=sflag, size = 0x4, scoped, tag = 'scoped memory for tpu_custom_call.1']
    #allocation5 [shape = 'u8[524288]{0}', space=vmem, size = 0x80000, scoped, tag = 'input window, operand 3, single buffered']
    #allocation6 [shape = 's32[1]{0}', space=sflag, size = 0x4, scoped, tag = 'scoped memory for tpu_custom_call.1']
    #allocation7 [shape = 'u8[65536]{0}', space=vmem, size = 0x10000, scoped, tag = 'output window, operand 0, single buffered']
    %9 = vsyncpa [#allocation3], 0
    %10 = vsyncpa [#allocation6], 0
    %11 = vsyncpa [#allocation4], 0
    // Predicated region
    $region2: #{tpu_custom_call.1} parent=1 // pred_check
      _
    $region3: #{tpu_custom_call.1} parent=1 // pred_check_branch
      %13 = sbr.rel (0) target = $region5
    $region4: #{tpu_custom_call.1} parent=1 // pred_region
      %15 = vsyncadd [#allocation3], 0
      %s16 = sshll.u32 %s0, 4
      %s17 = int_to_ptr.hbm [resolvable:$true] %s16
      %s18 = sshll.u32 [#allocation2], 4
      %s19 = int_to_ptr.vmem [resolvable:$true] %s18
      %24 = dma.hbm_to_vmem [thread:$0]  %s17, 2048, %s19, [#allocation3], 256, 256, 16
    $region5: #{tpu_custom_call.1} parent=1 // pred_fallthru
      _
    // Predicated region
    $region6: #{tpu_custom_call.1} parent=1 // pred_check
      _
    $region7: #{tpu_custom_call.1} parent=1 // pred_check_branch
      %26 = sbr.rel (0) target = $region9
    $region8: #{tpu_custom_call.1} parent=1 // pred_region
      _
    $region9: #{tpu_custom_call.1} parent=1 // pred_fallthru
      _
    // Predicated region
    $region10: #{tpu_custom_call.1} parent=1 // pred_check
      _
    $region11: #{tpu_custom_call.1} parent=1 // pred_check_branch
      %28 = sbr.rel (0) target = $region13
    $region12: #{tpu_custom_call.1} parent=1 // pred_region
      _
    $region13: #{tpu_custom_call.1} parent=1 // pred_fallthru
      _
    // Predicated region
    $region14: #{tpu_custom_call.1} parent=1 // pred_check
      _
    $region15: #{tpu_custom_call.1} parent=1 // pred_check_branch
      %30 = sbr.rel (0) target = $region17
    $region16: #{tpu_custom_call.1} parent=1 // pred_region
      %32 = vsyncadd [#allocation6], 0
      %s33 = sshll.u32 %s3, 4
      %s34 = int_to_ptr.hbm [resolvable:$true] %s33
      %s35 = sshll.u32 [#allocation5], 4
      %s36 = int_to_ptr.vmem [resolvable:$true] %s35
      %41 = dma.hbm_to_vmem [thread:$0]  %s34, 16384, %s36, [#allocation6], 256, 256, 16
    $region17: #{tpu_custom_call.1} parent=1 // pred_fallthru
      _
    // Predicated region
    $region18: #{tpu_custom_call.1} parent=1 // pred_check
      _
    $region19: #{tpu_custom_call.1} parent=1 // pred_check_branch
      %43 = sbr.rel (0) target = $region21
    $region20: #{tpu_custom_call.1} parent=1 // pred_region
      %45 = dma.done [#allocation3], 2048
    $region21: #{tpu_custom_call.1} parent=1 // pred_fallthru
      _
    // Predicated region
    $region22: #{tpu_custom_call.1} parent=1 // pred_check
      _
    $region23: #{tpu_custom_call.1} parent=1 // pred_check_branch
      %47 = sbr.rel (0) target = $region25
    $region24: #{tpu_custom_call.1} parent=1 // pred_region
      %49 = dma.done [#allocation6], 16384
    $region25: #{tpu_custom_call.1} parent=1 // pred_fallthru
      _
    %v50 = vld [vmem:[#allocation2] sm:$0xff]
    %v51 = vld [vmem:[#allocation2 + $0x8] sm:$0xff]
    %v52 = vld [vmem:[#allocation2 + $0x10] sm:$0xff]
    %v53 = vld [vmem:[#allocation2 + $0x18] sm:$0xff]
    %v54 = vld [vmem:[#allocation2 + $0x20] sm:$0xff]
    %v55 = vld [vmem:[#allocation2 + $0x28] sm:$0xff]
    %v56 = vld [vmem:[#allocation2 + $0x30] sm:$0xff]
    %v57 = vld [vmem:[#allocation2 + $0x38] sm:$0xff]
    %v58 = vld [vmem:[#allocation2 + $0x40] sm:$0xff]
    %v59 = vld [vmem:[#allocation2 + $0x48] sm:$0xff]
    %v60 = vld [vmem:[#allocation2 + $0x50] sm:$0xff]
    %v61 = vld [vmem:[#allocation2 + $0x58] sm:$0xff]
    %v62 = vld [vmem:[#allocation2 + $0x60] sm:$0xff]
    %v63 = vld [vmem:[#allocation2 + $0x68] sm:$0xff]
    %v64 = vld [vmem:[#allocation2 + $0x70] sm:$0xff]
    %v65 = vld [vmem:[#allocation2 + $0x78] sm:$0xff]
    %v66 = vmax.f32 %v50, %v51
    %67 = vmax.xlane.f32.xlu0 %v66
    %v68 = vpop.xlane.xlu0 %67
    %v69 = vmax.f32 %v52, %v53
    %70 = vmax.xlane.f32.xlu0 %v69
    %v71 = vpop.xlane.xlu0 %70
    %v72 = vmax.f32 %v54, %v55
    %73 = vmax.xlane.f32.xlu0 %v72
    %v74 = vpop.xlane.xlu0 %73
    %v75 = vmax.f32 %v56, %v57
    %76 = vmax.xlane.f32.xlu0 %v75
    %v77 = vpop.xlane.xlu0 %76
    %v78 = vmax.f32 %v58, %v59
    %79 = vmax.xlane.f32.xlu0 %v78
    %v80 = vpop.xlane.xlu0 %79
    %v81 = vmax.f32 %v60, %v61
    %82 = vmax.xlane.f32.xlu0 %v81
    %v83 = vpop.xlane.xlu0 %82
    %v84 = vmax.f32 %v62, %v63
    %85 = vmax.xlane.f32.xlu0 %v84
    %v86 = vpop.xlane.xlu0 %85
    %v87 = vmax.f32 %v64, %v65
    %88 = vmax.xlane.f32.xlu0 %v87
    %v89 = vpop.xlane.xlu0 %88
    %v90 = vadd.f32 %v50, %v51
    %91 = vadd.xlane.f32.xlu0 %v90
    %v92 = vpop.xlane.xlu0 %91
    %v93 = vadd.f32 %v52, %v53
    %94 = vadd.xlane.f32.xlu0 %v93
    %v95 = vpop.xlane.xlu0 %94
    %v96 = vadd.f32 %v54, %v55
    %97 = vadd.xlane.f32.xlu0 %v96
    %v98 = vpop.xlane.xlu0 %97
    %v99 = vadd.f32 %v56, %v57
    %100 = vadd.xlane.f32.xlu0 %v99
    %v101 = vpop.xlane.xlu0 %100
    %v102 = vadd.f32 %v58, %v59
    %103 = vadd.xlane.f32.xlu0 %v102
    %v104 = vpop.xlane.xlu0 %103
    %v105 = vadd.f32 %v60, %v61
    %106 = vadd.xlane.f32.xlu0 %v105
    %v107 = vpop.xlane.xlu0 %106
    %v108 = vadd.f32 %v62, %v63
    %109 = vadd.xlane.f32.xlu0 %v108
    %v110 = vpop.xlane.xlu0 %109
    %v111 = vadd.f32 %v64, %v65
    %112 = vadd.xlane.f32.xlu0 %v111
    %v113 = vpop.xlane.xlu0 %112
    %v114 = vrcp.pop 256.0
    %v115 = vmul.f32 256.0, %v114
    %v116 = vsub.f32 1.0, %v115
    %v117 = vmul.f32 %v114, %v116
    %v118 = vadd.f32 %v114, %v117
    %vm119 = vweird.f32 %v114
    %v120 = vsel %vm119, %v114, %v118
    %v121 = vmul.f32 %v92, %v120
    %v122 = vmul.f32 %v95, %v120
    %v123 = vmul.f32 %v98, %v120
    %v124 = vmul.f32 %v101, %v120
    %v125 = vmul.f32 %v104, %v120
    %v126 = vmul.f32 %v107, %v120
    %v127 = vmul.f32 %v110, %v120
    %v128 = vmul.f32 %v113, %v120
    %v137 = vlaneseq
    %v138 = vand.u32 %v137, 127
    %v139 = vperm.slane %v68, %v138
    %v140 = vadd.s32 %v138, 4294967288
    %v141 = vperm.slane %v71, %v140
    %vm142 = vcmask 130112
    %v143 = vsel %vm142, %v141, %v139
    %v144 = vadd.s32 %v138, 4294967280
    %v145 = vperm.slane %v74, %v144
    %vm146 = vcmask 195712
    %v147 = vsel %vm146, %v145, %v143
    %v148 = vadd.s32 %v138, 4294967272
    %v149 = vperm.slane %v77, %v148
    %vm150 = vcmask 261312
    %v151 = vsel %vm150, %v149, %v147
    %v152 = vperm.slane %v80, %v138
    %v153 = vperm.slane %v83, %v140
    %v154 = vsel %vm142, %v153, %v152
    %v155 = vperm.slane %v86, %v144
    %v156 = vsel %vm146, %v155, %v154
    %v157 = vperm.slane %v89, %v148
    %v158 = vsel %vm150, %v157, %v156
    %vm159 = vcmask 1041409
    %v160 = vsel %vm159, %v158, %v151
    %v170 = vperm.slane %v121, %v138
    %v171 = vperm.slane %v122, %v140
    %v172 = vsel %vm142, %v171, %v170
    %v173 = vperm.slane %v123, %v144
    %v174 = vsel %vm146, %v173, %v172
    %v175 = vperm.slane %v124, %v148
    %v176 = vsel %vm150, %v175, %v174
    %v177 = vperm.slane %v125, %v138
    %v178 = vperm.slane %v126, %v140
    %v179 = vsel %vm142, %v178, %v177
    %v180 = vperm.slane %v127, %v144
    %v181 = vsel %vm146, %v180, %v179
    %v182 = vperm.slane %v128, %v148
    %v183 = vsel %vm150, %v182, %v181
    %vm184 = vcmask 1043459
    %v185 = vsel %vm184, %v183, %v176
    %vm187 = vcmask 1041408
    %v188 = vsel %vm187, %v160, %v185
    %v189 = vld [vmem:[%s1] sm:$0xff]
    %v190 = vld [vmem:[%s1 + $0x8] sm:$0xff]
    %v191 = vld [vmem:[%s1 + $0x10] sm:$0xff]
    %v192 = vld [vmem:[%s1 + $0x18] sm:$0xff]
    %vm193 = vcmask 261120
    %v195 = vsel %vm193, %v188, 0
    %197 = vmatpush.msra.mxu0 0.0
    %198 = vmatpush.msra.mxu0 0.0
    %199 = vmatpush.msra.mxu0 0.0
    %200 = vmatpush.msra.mxu0 0.0
    %201 = vmatpush.msra.mxu0 0.0
    %202 = vmatpush.msra.mxu0 0.0
    %203 = vmatpush.msra.mxu0 0.0
    %204 = vmatpush.msra.mxu0 0.0
    %205 = vmatpush.msra.mxu0 0.0
    %206 = vmatpush.msra.mxu0 0.0
    %207 = vmatpush.msra.mxu0 0.0
    %208 = vmatpush.msra.mxu0 0.0
    %209 = vmatpush.msra.mxu0 %v192
    %210 = vmatpush.msra.mxu0 %v191
    %211 = vmatpush.msra.mxu0 %v190
    %212 = vmatpush.msra.mxu0 %v189
    %213 = vmatmul.f32.gmra.mxu0 %v195
    %v214 = vpop.f32.mrf.mxu0
    %v215 = vadd.f32 0.0, %v214
    %216 = vdwg.mxu0
    %v217 = vmax.f32 %v215, 0.0
    %v218 = vld [vmem:[%s2] sm:$0x3]
    %vm219 = vcmask 15360
    %v221 = vsel %vm219, %v217, 0
    %v224 = vsel %vm187, %v218, 0
    %226 = vmatpush.msra.mxu0 0.0
    %227 = vmatpush.msra.mxu0 0.0
    %228 = vmatpush.msra.mxu0 0.0
    %229 = vmatpush.msra.mxu0 0.0
    %230 = vmatpush.msra.mxu0 0.0
    %231 = vmatpush.msra.mxu0 0.0
    %232 = vmatpush.msra.mxu0 0.0
    %233 = vmatpush.msra.mxu0 0.0
    %234 = vmatpush.msra.mxu0 0.0
    %235 = vmatpush.msra.mxu0 0.0
    %236 = vmatpush.msra.mxu0 0.0
    %237 = vmatpush.msra.mxu0 0.0
    %238 = vmatpush.msra.mxu0 0.0
    %239 = vmatpush.msra.mxu0 0.0
    %240 = vmatpush.msra.mxu0 0.0
    %241 = vmatpush.msra.mxu0 %v224
    %242 = vmatmul.f32.gmra.mxu0 %v221
    %v243 = vpop.f32.mrf.mxu0
    %v244 = vadd.f32 0.0, %v243
    %245 = vdwg.mxu0
    %v247 = vrot.slane %v244, 2
    %v249 = vadd.f32 %v244, %v247
    %v250 = vxor.u32 %v249, 2147483648
    %v251 = vmul.f32 %v250, 1.442695
    %v252 = vpow.pop %v251
    %v253 = vadd.f32 %v252, 1.0
    %v254 = vrcp.pop %v253
    %v255 = vmul.f32 %v253, %v254
    %v256 = vsub.f32 1.0, %v255
    %v257 = vmul.f32 %v254, %v256
    %v258 = vadd.f32 %v254, %v257
    %vm259 = vweird.f32 %v253
    %vm260 = vweird.f32 %v254
    %vm261 = vmor %vm259, %vm260
    %v262 = vsel %vm261, %v254, %v258
    %v263 = vand.u32 2147483647, %v253
    %vm264 = vcmp.eq.f32.partialorder %v263, 8.507059e+37
    %v265 = vand.u32 %v253, 2147483648
    %v266 = vor.u32 1.1754944e-38, %v265
    %v267 = vsel %vm264, %v266, %v262
    %v268 = vmul.f32 1.0, %v267
    %v269 = vperm.slane %v268, 0
    %v270 = vlaneseq
    %v271 = vshrl.u32 %v270, 7
    %273 = vset.pattern.permute.xlu0 %v271
    %274 = vperm.xlu0 %273, %v269
    %v275 = vpop.permute.xlu0 %274
    %v276 = vlaneseq
    %v277 = vshrl.u32 %v276, 7
    %v278 = vadd.s32 %v277, 8
    %279 = vset.pattern.permute.xlu0 %v278
    %280 = vperm.xlu0 %279, %v269
    %v281 = vpop.permute.xlu0 %280
    %v282 = vlaneseq
    %v283 = vshrl.u32 %v282, 7
    %v284 = vadd.s32 %v283, 16
    %285 = vset.pattern.permute.xlu0 %v284
    %286 = vperm.xlu0 %285, %v269
    %v287 = vpop.permute.xlu0 %286
    %v288 = vlaneseq
    %v289 = vshrl.u32 %v288, 7
    %v290 = vadd.s32 %v289, 24
    %291 = vset.pattern.permute.xlu0 %v290
    %292 = vperm.xlu0 %291, %v269
    %v293 = vpop.permute.xlu0 %292
    %v294 = vperm.slane %v268, 1
    %v295 = vlaneseq
    %v296 = vshrl.u32 %v295, 7
    %298 = vset.pattern.permute.xlu0 %v296
    %299 = vperm.xlu0 %298, %v294
    %v300 = vpop.permute.xlu0 %299
    %v301 = vlaneseq
    %v302 = vshrl.u32 %v301, 7
    %v303 = vadd.s32 %v302, 8
    %304 = vset.pattern.permute.xlu0 %v303
    %305 = vperm.xlu0 %304, %v294
    %v306 = vpop.permute.xlu0 %305
    %v307 = vlaneseq
    %v308 = vshrl.u32 %v307, 7
    %v309 = vadd.s32 %v308, 16
    %310 = vset.pattern.permute.xlu0 %v309
    %311 = vperm.xlu0 %310, %v294
    %v312 = vpop.permute.xlu0 %311
    %v313 = vlaneseq
    %v314 = vshrl.u32 %v313, 7
    %v315 = vadd.s32 %v314, 24
    %316 = vset.pattern.permute.xlu0 %v315
    %317 = vperm.xlu0 %316, %v294
    %v318 = vpop.permute.xlu0 %317
    %v319 = vmul.f32 %v50, %v275
    %v320 = vmul.f32 %v51, %v275
    %v321 = vmul.f32 %v52, %v281
    %v322 = vmul.f32 %v53, %v281
    %v323 = vmul.f32 %v54, %v287
    %v324 = vmul.f32 %v55, %v287
    %v325 = vmul.f32 %v56, %v293
    %v326 = vmul.f32 %v57, %v293
    %v327 = vmul.f32 %v58, %v300
    %v328 = vmul.f32 %v59, %v300
    %v329 = vmul.f32 %v60, %v306
    %v330 = vmul.f32 %v61, %v306
    %v331 = vmul.f32 %v62, %v312
    %v332 = vmul.f32 %v63, %v312
    %v333 = vmul.f32 %v64, %v318
    %v334 = vmul.f32 %v65, %v318
    %v335 = vmax.f32 %v319, %v321
    %v336 = vmax.f32 %v335, %v323
    %v337 = vmax.f32 %v336, %v325
    %v338 = vrot.slane %v337, 4
    %v339 = vmax.f32 %v337, %v338
    %v340 = vrot.slane %v339, 2
    %v341 = vmax.f32 %v339, %v340
    %v342 = vrot.slane %v341, 1
    %v343 = vmax.f32 %v341, %v342
    %v344 = vmax.f32 %v320, %v322
    %v345 = vmax.f32 %v344, %v324
    %v346 = vmax.f32 %v345, %v326
    %v347 = vrot.slane %v346, 4
    %v348 = vmax.f32 %v346, %v347
    %v349 = vrot.slane %v348, 2
    %v350 = vmax.f32 %v348, %v349
    %v351 = vrot.slane %v350, 1
    %v352 = vmax.f32 %v350, %v351
    %v353 = vmax.f32 %v327, %v329
    %v354 = vmax.f32 %v353, %v331
    %v355 = vmax.f32 %v354, %v333
    %v356 = vrot.slane %v355, 4
    %v357 = vmax.f32 %v355, %v356
    %v358 = vrot.slane %v357, 2
    %v359 = vmax.f32 %v357, %v358
    %v360 = vrot.slane %v359, 1
    %v361 = vmax.f32 %v359, %v360
    %v362 = vmax.f32 %v328, %v330
    %v363 = vmax.f32 %v362, %v332
    %v364 = vmax.f32 %v363, %v334
    %v365 = vrot.slane %v364, 4
    %v366 = vmax.f32 %v364, %v365
    %v367 = vrot.slane %v366, 2
    %v368 = vmax.f32 %v366, %v367
    %v369 = vrot.slane %v368, 1
    %v370 = vmax.f32 %v368, %v369
    %v371 = vadd.f32 %v319, %v321
    %v372 = vadd.f32 %v371, %v323
    %v373 = vadd.f32 %v372, %v325
    %v374 = vrot.slane %v373, 4
    %v375 = vadd.f32 %v373, %v374
    %v376 = vrot.slane %v375, 2
    %v377 = vadd.f32 %v375, %v376
    %v378 = vrot.slane %v377, 1
    %v379 = vadd.f32 %v377, %v378
    %v380 = vadd.f32 %v320, %v322
    %v381 = vadd.f32 %v380, %v324
    %v382 = vadd.f32 %v381, %v326
    %v383 = vrot.slane %v382, 4
    %v384 = vadd.f32 %v382, %v383
    %v385 = vrot.slane %v384, 2
    %v386 = vadd.f32 %v384, %v385
    %v387 = vrot.slane %v386, 1
    %v388 = vadd.f32 %v386, %v387
    %v389 = vadd.f32 %v327, %v329
    %v390 = vadd.f32 %v389, %v331
    %v391 = vadd.f32 %v390, %v333
    %v392 = vrot.slane %v391, 4
    %v393 = vadd.f32 %v391, %v392
    %v394 = vrot.slane %v393, 2
    %v395 = vadd.f32 %v393, %v394
    %v396 = vrot.slane %v395, 1
    %v397 = vadd.f32 %v395, %v396
    %v398 = vadd.f32 %v328, %v330
    %v399 = vadd.f32 %v398, %v332
    %v400 = vadd.f32 %v399, %v334
    %v401 = vrot.slane %v400, 4
    %v402 = vadd.f32 %v400, %v401
    %v403 = vrot.slane %v402, 2
    %v404 = vadd.f32 %v402, %v403
    %v405 = vrot.slane %v404, 1
    %v406 = vadd.f32 %v404, %v405
    %v407 = vrcp.pop 32.0
    %v408 = vmul.f32 32.0, %v407
    %v409 = vsub.f32 1.0, %v408
    %v410 = vmul.f32 %v407, %v409
    %v411 = vadd.f32 %v407, %v410
    %vm412 = vweird.f32 %v407
    %v413 = vsel %vm412, %v407, %v411
    %v414 = vmul.f32 %v379, %v413
    %v415 = vmul.f32 %v388, %v413
    %v416 = vmul.f32 %v397, %v413
    %v417 = vmul.f32 %v406, %v413
    %v422 = vsel %vm159, %v361, %v343
    %v423 = vsel %vm159, %v370, %v352
    %v430 = vsel %vm159, %v416, %v414
    %v431 = vsel %vm159, %v417, %v415
    %v434 = vld [vmem:[#allocation5] sm:$0xff]
    %v435 = vld [vmem:[#allocation5 + $0x8] sm:$0xff]
    %v436 = vld [vmem:[#allocation5 + $0x10] sm:$0xff]
    %v437 = vld [vmem:[#allocation5 + $0x18] sm:$0xff]
    %v438 = vld [vmem:[#allocation5 + $0x20] sm:$0xff]
    %v439 = vld [vmem:[#allocation5 + $0x28] sm:$0xff]
    %v440 = vld [vmem:[#allocation5 + $0x30] sm:$0xff]
    %v441 = vld [vmem:[#allocation5 + $0x38] sm:$0xff]
    %v442 = vld [vmem:[#allocation5 + $0x40] sm:$0xff]
    %v443 = vld [vmem:[#allocation5 + $0x48] sm:$0xff]
    %v444 = vld [vmem:[#allocation5 + $0x50] sm:$0xff]
    %v445 = vld [vmem:[#allocation5 + $0x58] sm:$0xff]
    %v446 = vld [vmem:[#allocation5 + $0x60] sm:$0xff]
    %v447 = vld [vmem:[#allocation5 + $0x68] sm:$0xff]
    %v448 = vld [vmem:[#allocation5 + $0x70] sm:$0xff]
    %v449 = vld [vmem:[#allocation5 + $0x78] sm:$0xff]
    %v450 = vld [vmem:[#allocation5 + $0x80] sm:$0xff]
    %v451 = vld [vmem:[#allocation5 + $0x88] sm:$0xff]
    %v452 = vld [vmem:[#allocation5 + $0x90] sm:$0xff]
    %v453 = vld [vmem:[#allocation5 + $0x98] sm:$0xff]
    %v454 = vld [vmem:[#allocation5 + $0xa0] sm:$0xff]
    %v455 = vld [vmem:[#allocation5 + $0xa8] sm:$0xff]
    %v456 = vld [vmem:[#allocation5 + $0xb0] sm:$0xff]
    %v457 = vld [vmem:[#allocation5 + $0xb8] sm:$0xff]
    %v458 = vld [vmem:[#allocation5 + $0xc0] sm:$0xff]
    %v459 = vld [vmem:[#allocation5 + $0xc8] sm:$0xff]
    %v460 = vld [vmem:[#allocation5 + $0xd0] sm:$0xff]
    %v461 = vld [vmem:[#allocation5 + $0xd8] sm:$0xff]
    %v462 = vld [vmem:[#allocation5 + $0xe0] sm:$0xff]
    %v463 = vld [vmem:[#allocation5 + $0xe8] sm:$0xff]
    %v464 = vld [vmem:[#allocation5 + $0xf0] sm:$0xff]
    %v465 = vld [vmem:[#allocation5 + $0xf8] sm:$0xff]
    %v466 = vld [vmem:[#allocation5 + $0x100] sm:$0xff]
    %v467 = vld [vmem:[#allocation5 + $0x108] sm:$0xff]
    %v468 = vld [vmem:[#allocation5 + $0x110] sm:$0xff]
    %v469 = vld [vmem:[#allocation5 + $0x118] sm:$0xff]
    %v470 = vld [vmem:[#allocation5 + $0x120] sm:$0xff]
    %v471 = vld [vmem:[#allocation5 + $0x128] sm:$0xff]
    %v472 = vld [vmem:[#allocation5 + $0x130] sm:$0xff]
    %v473 = vld [vmem:[#allocation5 + $0x138] sm:$0xff]
    %v474 = vld [vmem:[#allocation5 + $0x140] sm:$0xff]
    %v475 = vld [vmem:[#allocation5 + $0x148] sm:$0xff]
    %v476 = vld [vmem:[#allocation5 + $0x150] sm:$0xff]
    %v477 = vld [vmem:[#allocation5 + $0x158] sm:$0xff]
    %v478 = vld [vmem:[#allocation5 + $0x160] sm:$0xff]
    %v479 = vld [vmem:[#allocation5 + $0x168] sm:$0xff]
    %v480 = vld [vmem:[#allocation5 + $0x170] sm:$0xff]
    %v481 = vld [vmem:[#allocation5 + $0x178] sm:$0xff]
    %v482 = vld [vmem:[#allocation5 + $0x180] sm:$0xff]
    %v483 = vld [vmem:[#allocation5 + $0x188] sm:$0xff]
    %v484 = vld [vmem:[#allocation5 + $0x190] sm:$0xff]
    %v485 = vld [vmem:[#allocation5 + $0x198] sm:$0xff]
    %v486 = vld [vmem:[#allocation5 + $0x1a0] sm:$0xff]
    %v487 = vld [vmem:[#allocation5 + $0x1a8] sm:$0xff]
    %v488 = vld [vmem:[#allocation5 + $0x1b0] sm:$0xff]
    %v489 = vld [vmem:[#allocation5 + $0x1b8] sm:$0xff]
    %v490 = vld [vmem:[#allocation5 + $0x1c0] sm:$0xff]
    %v491 = vld [vmem:[#allocation5 + $0x1c8] sm:$0xff]
    %v492 = vld [vmem:[#allocation5 + $0x1d0] sm:$0xff]
    %v493 = vld [vmem:[#allocation5 + $0x1d8] sm:$0xff]
    %v494 = vld [vmem:[#allocation5 + $0x1e0] sm:$0xff]
    %v495 = vld [vmem:[#allocation5 + $0x1e8] sm:$0xff]
    %v496 = vld [vmem:[#allocation5 + $0x1f0] sm:$0xff]
    %v497 = vld [vmem:[#allocation5 + $0x1f8] sm:$0xff]
    %v498 = vld [vmem:[#allocation5 + $0x200] sm:$0xff]
    %v499 = vld [vmem:[#allocation5 + $0x208] sm:$0xff]
    %v500 = vld [vmem:[#allocation5 + $0x210] sm:$0xff]
    %v501 = vld [vmem:[#allocation5 + $0x218] sm:$0xff]
    %v502 = vld [vmem:[#allocation5 + $0x220] sm:$0xff]
    %v503 = vld [vmem:[#allocation5 + $0x228] sm:$0xff]
    %v504 = vld [vmem:[#allocation5 + $0x230] sm:$0xff]
    %v505 = vld [vmem:[#allocation5 + $0x238] sm:$0xff]
    %v506 = vld [vmem:[#allocation5 + $0x240] sm:$0xff]
    %v507 = vld [vmem:[#allocation5 + $0x248] sm:$0xff]
    %v508 = vld [vmem:[#allocation5 + $0x250] sm:$0xff]
    %v509 = vld [vmem:[#allocation5 + $0x258] sm:$0xff]
    %v510 = vld [vmem:[#allocation5 + $0x260] sm:$0xff]
    %v511 = vld [vmem:[#allocation5 + $0x268] sm:$0xff]
    %v512 = vld [vmem:[#allocation5 + $0x270] sm:$0xff]
    %v513 = vld [vmem:[#allocation5 + $0x278] sm:$0xff]
    %v514 = vld [vmem:[#allocation5 + $0x280] sm:$0xff]
    %v515 = vld [vmem:[#allocation5 + $0x288] sm:$0xff]
    %v516 = vld [vmem:[#allocation5 + $0x290] sm:$0xff]
    %v517 = vld [vmem:[#allocation5 + $0x298] sm:$0xff]
    %v518 = vld [vmem:[#allocation5 + $0x2a0] sm:$0xff]
    %v519 = vld [vmem:[#allocation5 + $0x2a8] sm:$0xff]
    %v520 = vld [vmem:[#allocation5 + $0x2b0] sm:$0xff]
    %v521 = vld [vmem:[#allocation5 + $0x2b8] sm:$0xff]
    %v522 = vld [vmem:[#allocation5 + $0x2c0] sm:$0xff]
    %v523 = vld [vmem:[#allocation5 + $0x2c8] sm:$0xff]
    %v524 = vld [vmem:[#allocation5 + $0x2d0] sm:$0xff]
    %v525 = vld [vmem:[#allocation5 + $0x2d8] sm:$0xff]
    %v526 = vld [vmem:[#allocation5 + $0x2e0] sm:$0xff]
    %v527 = vld [vmem:[#allocation5 + $0x2e8] sm:$0xff]
    %v528 = vld [vmem:[#allocation5 + $0x2f0] sm:$0xff]
    %v529 = vld [vmem:[#allocation5 + $0x2f8] sm:$0xff]
    %v530 = vld [vmem:[#allocation5 + $0x300] sm:$0xff]
    %v531 = vld [vmem:[#allocation5 + $0x308] sm:$0xff]
    %v532 = vld [vmem:[#allocation5 + $0x310] sm:$0xff]
    %v533 = vld [vmem:[#allocation5 + $0x318] sm:$0xff]
    %v534 = vld [vmem:[#allocation5 + $0x320] sm:$0xff]
    %v535 = vld [vmem:[#allocation5 + $0x328] sm:$0xff]
    %v536 = vld [vmem:[#allocation5 + $0x330] sm:$0xff]
    %v537 = vld [vmem:[#allocation5 + $0x338] sm:$0xff]
    %v538 = vld [vmem:[#allocation5 + $0x340] sm:$0xff]
    %v539 = vld [vmem:[#allocation5 + $0x348] sm:$0xff]
    %v540 = vld [vmem:[#allocation5 + $0x350] sm:$0xff]
    %v541 = vld [vmem:[#allocation5 + $0x358] sm:$0xff]
    %v542 = vld [vmem:[#allocation5 + $0x360] sm:$0xff]
    %v543 = vld [vmem:[#allocation5 + $0x368] sm:$0xff]
    %v544 = vld [vmem:[#allocation5 + $0x370] sm:$0xff]
    %v545 = vld [vmem:[#allocation5 + $0x378] sm:$0xff]
    %v546 = vld [vmem:[#allocation5 + $0x380] sm:$0xff]
    %v547 = vld [vmem:[#allocation5 + $0x388] sm:$0xff]
    %v548 = vld [vmem:[#allocation5 + $0x390] sm:$0xff]
    %v549 = vld [vmem:[#allocation5 + $0x398] sm:$0xff]
    %v550 = vld [vmem:[#allocation5 + $0x3a0] sm:$0xff]
    %v551 = vld [vmem:[#allocation5 + $0x3a8] sm:$0xff]
    %v552 = vld [vmem:[#allocation5 + $0x3b0] sm:$0xff]
    %v553 = vld [vmem:[#allocation5 + $0x3b8] sm:$0xff]
    %v554 = vld [vmem:[#allocation5 + $0x3c0] sm:$0xff]
    %v555 = vld [vmem:[#allocation5 + $0x3c8] sm:$0xff]
    %v556 = vld [vmem:[#allocation5 + $0x3d0] sm:$0xff]
    %v557 = vld [vmem:[#allocation5 + $0x3d8] sm:$0xff]
    %v558 = vld [vmem:[#allocation5 + $0x3e0] sm:$0xff]
    %v559 = vld [vmem:[#allocation5 + $0x3e8] sm:$0xff]
    %v560 = vld [vmem:[#allocation5 + $0x3f0] sm:$0xff]
    %v561 = vld [vmem:[#allocation5 + $0x3f8] sm:$0xff]
    %562 = vmatpush.msra.mxu0 %v464
    %563 = vmatpush.msra.mxu0 %v462
    %564 = vmatpush.msra.mxu0 %v460
    %565 = vmatpush.msra.mxu0 %v458
    %566 = vmatpush.msra.mxu0 %v456
    %567 = vmatpush.msra.mxu0 %v454
    %568 = vmatpush.msra.mxu0 %v452
    %569 = vmatpush.msra.mxu0 %v450
    %570 = vmatpush.msra.mxu0 %v448
    %571 = vmatpush.msra.mxu0 %v446
    %572 = vmatpush.msra.mxu0 %v444
    %573 = vmatpush.msra.mxu0 %v442
    %574 = vmatpush.msra.mxu0 %v440
    %575 = vmatpush.msra.mxu0 %v438
    %576 = vmatpush.msra.mxu0 %v436
    %577 = vmatpush.msra.mxu0 %v434
    %578 = vmatmul.f32.gmra.mxu0 %v422
    %v579 = vpop.f32.mrf.mxu0
    %v580 = vadd.f32 0.0, %v579
    %581 = vdwg.mxu0
    %582 = vmatpush.msra.mxu0 %v496
    %583 = vmatpush.msra.mxu0 %v494
    %584 = vmatpush.msra.mxu0 %v492
    %585 = vmatpush.msra.mxu0 %v490
    %586 = vmatpush.msra.mxu0 %v488
    %587 = vmatpush.msra.mxu0 %v486
    %588 = vmatpush.msra.mxu0 %v484
    %589 = vmatpush.msra.mxu0 %v482
    %590 = vmatpush.msra.mxu0 %v480
    %591 = vmatpush.msra.mxu0 %v478
    %592 = vmatpush.msra.mxu0 %v476
    %593 = vmatpush.msra.mxu0 %v474
    %594 = vmatpush.msra.mxu0 %v472
    %595 = vmatpush.msra.mxu0 %v470
    %596 = vmatpush.msra.mxu0 %v468
    %597 = vmatpush.msra.mxu0 %v466
    %598 = vmatmul.f32.gmra.mxu0 %v423
    %v599 = vpop.f32.mrf.mxu0
    %v600 = vadd.f32 %v580, %v599
    %601 = vdwg.mxu0
    %602 = vmatpush.msra.mxu0 %v528
    %603 = vmatpush.msra.mxu0 %v526
    %604 = vmatpush.msra.mxu0 %v524
    %605 = vmatpush.msra.mxu0 %v522
    %606 = vmatpush.msra.mxu0 %v520
    %607 = vmatpush.msra.mxu0 %v518
    %608 = vmatpush.msra.mxu0 %v516
    %609 = vmatpush.msra.mxu0 %v514
    %610 = vmatpush.msra.mxu0 %v512
    %611 = vmatpush.msra.mxu0 %v510
    %612 = vmatpush.msra.mxu0 %v508
    %613 = vmatpush.msra.mxu0 %v506
    %614 = vmatpush.msra.mxu0 %v504
    %615 = vmatpush.msra.mxu0 %v502
    %616 = vmatpush.msra.mxu0 %v500
    %617 = vmatpush.msra.mxu0 %v498
    %618 = vmatmul.f32.gmra.mxu0 %v430
    %v619 = vpop.f32.mrf.mxu0
    %v620 = vadd.f32 %v600, %v619
    %621 = vdwg.mxu0
    %622 = vmatpush.msra.mxu0 %v560
    %623 = vmatpush.msra.mxu0 %v558
    %624 = vmatpush.msra.mxu0 %v556
    %625 = vmatpush.msra.mxu0 %v554
    %626 = vmatpush.msra.mxu0 %v552
    %627 = vmatpush.msra.mxu0 %v550
    %628 = vmatpush.msra.mxu0 %v548
    %629 = vmatpush.msra.mxu0 %v546
    %630 = vmatpush.msra.mxu0 %v544
    %631 = vmatpush.msra.mxu0 %v542
    %632 = vmatpush.msra.mxu0 %v540
    %633 = vmatpush.msra.mxu0 %v538
    %634 = vmatpush.msra.mxu0 %v536
    %635 = vmatpush.msra.mxu0 %v534
    %636 = vmatpush.msra.mxu0 %v532
    %637 = vmatpush.msra.mxu0 %v530
    %638 = vmatmul.f32.gmra.mxu0 %v431
    %v639 = vpop.f32.mrf.mxu0
    %v640 = vadd.f32 %v620, %v639
    %641 = vdwg.mxu0
    %642 = vmatpush.msra.mxu0 %v465
    %643 = vmatpush.msra.mxu0 %v463
    %644 = vmatpush.msra.mxu0 %v461
    %645 = vmatpush.msra.mxu0 %v459
    %646 = vmatpush.msra.mxu0 %v457
    %647 = vmatpush.msra.mxu0 %v455
    %648 = vmatpush.msra.mxu0 %v453
    %649 = vmatpush.msra.mxu0 %v451
    %650 = vmatpush.msra.mxu0 %v449
    %651 = vmatpush.msra.mxu0 %v447
    %652 = vmatpush.msra.mxu0 %v445
    %653 = vmatpush.msra.mxu0 %v443
    %654 = vmatpush.msra.mxu0 %v441
    %655 = vmatpush.msra.mxu0 %v439
    %656 = vmatpush.msra.mxu0 %v437
    %657 = vmatpush.msra.mxu0 %v435
    %658 = vmatmul.f32.gmra.mxu0 %v422
    %v659 = vpop.f32.mrf.mxu0
    %v660 = vadd.f32 0.0, %v659
    %661 = vdwg.mxu0
    %662 = vmatpush.msra.mxu0 %v497
    %663 = vmatpush.msra.mxu0 %v495
    %664 = vmatpush.msra.mxu0 %v493
    %665 = vmatpush.msra.mxu0 %v491
    %666 = vmatpush.msra.mxu0 %v489
    %667 = vmatpush.msra.mxu0 %v487
    %668 = vmatpush.msra.mxu0 %v485
    %669 = vmatpush.msra.mxu0 %v483
    %670 = vmatpush.msra.mxu0 %v481
    %671 = vmatpush.msra.mxu0 %v479
    %672 = vmatpush.msra.mxu0 %v477
    %673 = vmatpush.msra.mxu0 %v475
    %674 = vmatpush.msra.mxu0 %v473
    %675 = vmatpush.msra.mxu0 %v471
    %676 = vmatpush.msra.mxu0 %v469
    %677 = vmatpush.msra.mxu0 %v467
    %678 = vmatmul.f32.gmra.mxu0 %v423
    %v679 = vpop.f32.mrf.mxu0
    %v680 = vadd.f32 %v660, %v679
    %681 = vdwg.mxu0
    %682 = vmatpush.msra.mxu0 %v529
    %683 = vmatpush.msra.mxu0 %v527
    %684 = vmatpush.msra.mxu0 %v525
    %685 = vmatpush.msra.mxu0 %v523
    %686 = vmatpush.msra.mxu0 %v521
    %687 = vmatpush.msra.mxu0 %v519
    %688 = vmatpush.msra.mxu0 %v517
    %689 = vmatpush.msra.mxu0 %v515
    %690 = vmatpush.msra.mxu0 %v513
    %691 = vmatpush.msra.mxu0 %v511
    %692 = vmatpush.msra.mxu0 %v509
    %693 = vmatpush.msra.mxu0 %v507
    %694 = vmatpush.msra.mxu0 %v505
    %695 = vmatpush.msra.mxu0 %v503
    %696 = vmatpush.msra.mxu0 %v501
    %697 = vmatpush.msra.mxu0 %v499
    %698 = vmatmul.f32.gmra.mxu0 %v430
    %v699 = vpop.f32.mrf.mxu0
    %v700 = vadd.f32 %v680, %v699
    %701 = vdwg.mxu0
    %702 = vmatpush.msra.mxu0 %v561
    %703 = vmatpush.msra.mxu0 %v559
    %704 = vmatpush.msra.mxu0 %v557
    %705 = vmatpush.msra.mxu0 %v555
    %706 = vmatpush.msra.mxu0 %v553
    %707 = vmatpush.msra.mxu0 %v551
    %708 = vmatpush.msra.mxu0 %v549
    %709 = vmatpush.msra.mxu0 %v547
    %710 = vmatpush.msra.mxu0 %v545
    %711 = vmatpush.msra.mxu0 %v543
    %712 = vmatpush.msra.mxu0 %v541
    %713 = vmatpush.msra.mxu0 %v539
    %714 = vmatpush.msra.mxu0 %v537
    %715 = vmatpush.msra.mxu0 %v535
    %716 = vmatpush.msra.mxu0 %v533
    %717 = vmatpush.msra.mxu0 %v531
    %718 = vmatmul.f32.gmra.mxu0 %v431
    %v719 = vpop.f32.mrf.mxu0
    %v720 = vadd.f32 %v700, %v719
    %721 = vdwg.mxu0
    %v722 = vxor.u32 %v640, 2147483648
    %v723 = vxor.u32 %v720, 2147483648
    %v724 = vmul.f32 %v722, 1.442695
    %v725 = vpow.pop %v724
    %v726 = vmul.f32 %v723, 1.442695
    %v727 = vpow.pop %v726
    %v728 = vadd.f32 %v725, 1.0
    %v729 = vadd.f32 %v727, 1.0
    %v730 = vrcp.pop %v728
    %v731 = vmul.f32 %v728, %v730
    %v732 = vsub.f32 1.0, %v731
    %v733 = vmul.f32 %v730, %v732
    %v734 = vadd.f32 %v730, %v733
    %vm735 = vweird.f32 %v728
    %vm736 = vweird.f32 %v730
    %vm737 = vmor %vm735, %vm736
    %v738 = vsel %vm737, %v730, %v734
    %v739 = vand.u32 2147483647, %v728
    %vm740 = vcmp.eq.f32.partialorder %v739, 8.507059e+37
    %v741 = vand.u32 %v728, 2147483648
    %v742 = vor.u32 1.1754944e-38, %v741
    %v743 = vsel %vm740, %v742, %v738
    %v744 = vmul.f32 1.0, %v743
    %v745 = vrcp.pop %v729
    %v746 = vmul.f32 %v729, %v745
    %v747 = vsub.f32 1.0, %v746
    %v748 = vmul.f32 %v745, %v747
    %v749 = vadd.f32 %v745, %v748
    %vm750 = vweird.f32 %v729
    %vm751 = vweird.f32 %v745
    %vm752 = vmor %vm750, %vm751
    %v753 = vsel %vm752, %v745, %v749
    %v754 = vand.u32 2147483647, %v729
    %vm755 = vcmp.eq.f32.partialorder %v754, 8.507059e+37
    %v756 = vand.u32 %v729, 2147483648
    %v757 = vor.u32 1.1754944e-38, %v756
    %v758 = vsel %vm755, %v757, %v753
    %v759 = vmul.f32 1.0, %v758
    %v762 = vrot.slane %v759, 7
    %vm763 = vcmask 1040384
    %v764 = vsel %vm763, %v744, %v762
    %v765 = vsel %vm159, %v744, %v762
    %v766 = vrot.slane %v765, 1
    %v767 = vperm.slane %v764, 0
    %v768 = vperm.slane %v764, 1
    %v769 = vperm.slane %v766, 0
    %v770 = vperm.slane %v766, 1
    %v775 = vmul.f32 %v319, %v767
    %v776 = vmul.f32 %v320, %v768
    %v777 = vmul.f32 %v321, %v767
    %v778 = vmul.f32 %v322, %v768
    %v779 = vmul.f32 %v323, %v767
    %v780 = vmul.f32 %v324, %v768
    %v781 = vmul.f32 %v325, %v767
    %v782 = vmul.f32 %v326, %v768
    %v783 = vmul.f32 %v327, %v769
    %v784 = vmul.f32 %v328, %v770
    %v785 = vmul.f32 %v329, %v769
    %v786 = vmul.f32 %v330, %v770
    %v787 = vmul.f32 %v331, %v769
    %v788 = vmul.f32 %v332, %v770
    %v789 = vmul.f32 %v333, %v769
    %v790 = vmul.f32 %v334, %v770
    %791 = vst [vmem:[#allocation7] sm:$0xff] %v775
    %792 = vst [vmem:[#allocation7 + $0x8] sm:$0xff] %v776
    %793 = vst [vmem:[#allocation7 + $0x10] sm:$0xff] %v777
    %794 = vst [vmem:[#allocation7 + $0x18] sm:$0xff] %v778
    %795 = vst [vmem:[#allocation7 + $0x20] sm:$0xff] %v779
    %796 = vst [vmem:[#allocation7 + $0x28] sm:$0xff] %v780
    %797 = vst [vmem:[#allocation7 + $0x30] sm:$0xff] %v781
    %798 = vst [vmem:[#allocation7 + $0x38] sm:$0xff] %v782
    %799 = vst [vmem:[#allocation7 + $0x40] sm:$0xff] %v783
    %800 = vst [vmem:[#allocation7 + $0x48] sm:$0xff] %v784
    %801 = vst [vmem:[#allocation7 + $0x50] sm:$0xff] %v785
    %802 = vst [vmem:[#allocation7 + $0x58] sm:$0xff] %v786
    %803 = vst [vmem:[#allocation7 + $0x60] sm:$0xff] %v787
    %804 = vst [vmem:[#allocation7 + $0x68] sm:$0xff] %v788
    %805 = vst [vmem:[#allocation7 + $0x70] sm:$0xff] %v789
    %806 = vst [vmem:[#allocation7 + $0x78] sm:$0xff] %v790
    // Predicated region
    $region26: #{tpu_custom_call.1} parent=1 // pred_check
      _
    $region27: #{tpu_custom_call.1} parent=1 // pred_check_branch
      %808 = sbr.rel (0) target = $region29
    $region28: #{tpu_custom_call.1} parent=1 // pred_region
      %810 = vsyncadd [#allocation4], 0
      %s811 = sshll.u32 [#allocation7], 4
      %s812 = int_to_ptr.vmem [resolvable:$true] %s811
      %s813 = sshll.u32 %s4, 4
      %s814 = int_to_ptr.hbm [resolvable:$true] %s813
      %819 = dma.vmem_to_hbm [thread:$0]  %s812, 2048, %s814, [#allocation4], 256, 256, 16
    $region29: #{tpu_custom_call.1} parent=1 // pred_fallthru
      _
    // Predicated region
    $region30: #{tpu_custom_call.1} parent=1 // pred_check
      _
    $region31: #{tpu_custom_call.1} parent=1 // pred_check_branch
      %821 = sbr.rel (0) target = $region33
    $region32: #{tpu_custom_call.1} parent=1 // pred_region
      %823 = dma.done [#allocation4], 2048
    $region33: #{tpu_custom_call.1} parent=1 // pred_fallthru
      _
    %824 = vsyncpa [#allocation3], 1
    %825 = vsyncpa [#allocation6], 1
    %826 = vsyncpa [#allocation4], 1

</llo_original>
